<compile_context>
chip_gen: v5e
topology: v5e:2x2
jax: 0.10.0
libtpu: 0.0.40
codegen_flags: <defaults>
</compile_context>

<pallas_src>
import math
import functools

import jax
import jax.numpy as jnp
from jax import lax
from jax.experimental import pallas as pl
from jax.experimental.pallas import tpu as pltpu


def mhsa_kernel(x_ref, wqkv_ref, bqkv_ref, wout_ref, bout_ref, o_ref, res_ref,
                *, heads, head_dim, batch_tile, seq_len):
    """One batch tile (Bt batch elements) per grid step.

    x_ref    : (Bt, T, K)  bf16 (or f32; cast in-kernel)
    wqkv_ref : (K, 3K)     bf16   columns grouped per head as [q | k | v]; Q cols pre-scaled by 1/sqrt(s)
    bqkv_ref : (1, 3K)     f32    Q chunks pre-scaled
    wout_ref : (K, K)      bf16
    bout_ref : (1, K)      f32
    o_ref    : (Bt, T, K)  f32
    res_ref  : (Bt, T, K)  bf16 VMEM scratch — staged per-head outputs
    """
    s = head_dim
    Bt, T = batch_tile, seq_len
    K = x_ref.shape[2]
    M = Bt * T

    # Flatten batch*seq so the projection matmuls are tall (fills the MXU M dim).
    # The astype is a no-op when the caller already supplies bf16.
    x2 = x_ref[...].reshape(M, K).astype(jnp.bfloat16)                        # (M, K)

    # Fused QKV projection for ALL heads at once: full-width (N = 3K) bf16 MXU matmul,
    # f32 accumulation, bias add, then a single cast of the activation to bf16.
    qkv = jnp.dot(x2, wqkv_ref[...], preferred_element_type=jnp.float32)      # (M, 3K) f32
    qkv = (qkv + bqkv_ref[...]).astype(jnp.bfloat16)
    qkv3 = qkv.reshape(Bt, T, 3 * K)                                          # (Bt, T, 3K)

    # Static (fully unrolled) head loop: the EUP-bound softmax of one head overlaps
    # the MXU work of neighbouring heads.  For very large head counts switch to a
    # partially unrolled lax.fori_loop to bound vreg pressure.
    for h in range(heads):
        base = 3 * s * h
        q = qkv3[:, :, base:base + s]              # (Bt, T, s)  already scaled by 1/sqrt(s)
        k = qkv3[:, :, base + s:base + 2 * s]      # (Bt, T, s)
        v = qkv3[:, :, base + 2 * s:base + 3 * s]  # (Bt, T, s)

        # Batched q @ k^T; no transpose materialized.
        scores = jnp.einsum("btd,bud->btu", q, k,
                            preferred_element_type=jnp.float32)               # (Bt, T, T) f32

        # Numerically-stable softmax in f32; the divide runs on the EUP.
        m = jnp.max(scores, axis=-1, keepdims=True)
        e = jnp.exp(scores - m)
        p = (e * pl.reciprocal(jnp.sum(e, axis=-1, keepdims=True), approx=True)
             ).astype(jnp.bfloat16)

        head_out = jnp.einsum("btu,bud->btd", p, v,
                              preferred_element_type=jnp.float32)             # (Bt, T, s) f32

        # Stage this head's output at lane offset h*s; the output projection then
        # runs once with full contraction depth K.
        res_ref[:, :, h * s:(h + 1) * s] = head_out.astype(jnp.bfloat16)

    res2 = res_ref[...].reshape(M, K)                                         # (M, K) bf16
    out = jnp.dot(res2, wout_ref[...], preferred_element_type=jnp.float32) + bout_ref[...]
    o_ref[...] = out.reshape(Bt, T, K).astype(o_ref.dtype)


def _pack_params(w_qkv_t, b_qkv, w_out_t, b_out, heads):
    """Host-side one-time prep of canonical (PyTorch-convention) parameters.

    w_qkv_t : (K, 3K)  transposed tokqv weight; columns per head are [q | k | v] (width 3s)
    b_qkv   : (3K,)
    w_out_t : (K, K)   transposed unifyheads weight
    b_out   : (K,)
    """
    K = w_qkv_t.shape[0]
    s = K // heads
    scale = 1.0 / math.sqrt(s)

    # Fold the 1/sqrt(s) attention scale into the Q chunk of every head.
    col_scale = jnp.tile(
        jnp.concatenate([jnp.full((s,), scale, jnp.float32),
                         jnp.ones((2 * s,), jnp.float32)]), heads)            # (3K,)

    w_qkv2 = (w_qkv_t.astype(jnp.float32) * col_scale[None, :]).astype(jnp.bfloat16)  # (K, 3K)
    b_qkv2 = (b_qkv.reshape(-1).astype(jnp.float32) * col_scale).reshape(1, 3 * K)    # f32

    w_out2 = w_out_t.astype(jnp.bfloat16)                                      # (K, K)
    b_out2 = b_out.reshape(1, K).astype(jnp.float32)
    return w_qkv2, b_qkv2, w_out2, b_out2


def _choose_batch_tile(B, T):
    """Pick Bt so the projection matmuls have M = Bt*T rows in the ~256-512 range
    (fills the 256-wide/deep v6e/v7x MXU), while preferring >= 2 parallel grid steps
    (two v7x TensorCores) whenever that still leaves M >= 128."""
    target_m = 512
    bt = max(1, min(B, target_m // max(T, 1)))
    while B % bt != 0:                       # exact blocks: no padding/masking path
        bt -= 1
    if bt == B and B > 1 and (B // 2) * T >= 128:
        bt = max(d for d in range(1, B) if B % d == 0)
    return bt


def mh_self_attention(x, w_qkv_t, b_qkv, w_out_t, b_out, heads):
    """x: (B, T, K) bf16 or f32.  Params: w_qkv_t (K, 3K), b_qkv (3K,), w_out_t (K, K), b_out (K,)."""
    B, T, K = x.shape
    assert K % heads == 0
    s = K // heads
    w_qkv2, b_qkv2, w_out2, b_out2 = _pack_params(w_qkv_t, b_qkv, w_out_t, b_out, heads)

    Bt = _choose_batch_tile(B, T)
    M = Bt * T
    kernel = functools.partial(mhsa_kernel, heads=heads, head_dim=s,
                               batch_tile=Bt, seq_len=T)

    # VMEM budget: resident weights (default double-buffered), double-buffered x/out
    # blocks, bf16 staging scratch, activation temporaries (qkv, scores, out) w/ slack.
    x_bytes = jnp.dtype(x.dtype).itemsize
    weight_bytes = (w_qkv2.size + w_out2.size) * 2 + (b_qkv2.size + b_out2.size) * 4
    block_bytes = 2 * M * K * (x_bytes + 4)                  # x + out blocks, double-buffered
    scratch_bytes = M * K * 2
    temp_bytes = (M * 3 * K * 6 + heads * Bt * T * T * 8 + M * K * 4) * 2    # 2x slack
    needed = 2 * weight_bytes + block_bytes + scratch_bytes + temp_bytes + (8 << 20)
    try:
        vmem_cap = pltpu.get_tpu_info().vmem_capacity_bytes  # 128 MiB v5e/v6e, 64 MiB v7x
    except Exception:
        vmem_cap = 64 << 20                                  # conservative fallback
    vmem_limit = int(min(max(needed, 32 << 20), (vmem_cap * 3) // 4))

    return pl.pallas_call(
        kernel,
        out_shape=jax.ShapeDtypeStruct((B, T, K), jnp.float32),
        grid_spec=pltpu.PrefetchScalarGridSpec(
            num_scalar_prefetch=0,
            grid=(B // Bt,),
            in_specs=[
                pl.BlockSpec((Bt, T, K), lambda i: (i, 0, 0)),       # x: one batch tile
                pl.BlockSpec((K, 3 * K), lambda i: (0, 0)),          # QKV weights (resident)
                pl.BlockSpec((1, 3 * K), lambda i: (0, 0)),          # QKV bias
                pl.BlockSpec((K, K), lambda i: (0, 0)),              # out-proj weights (resident)
                pl.BlockSpec((1, K), lambda i: (0, 0)),              # out-proj bias
            ],
            out_specs=pl.BlockSpec((Bt, T, K), lambda i: (i, 0, 0)),
            scratch_shapes=[pltpu.VMEM((Bt, T, K), jnp.bfloat16)],   # staged head outputs
        ),
        compiler_params=pltpu.CompilerParams(
            dimension_semantics=("parallel",),
            vmem_limit_bytes=vmem_limit,
        ),
    )(x, w_qkv2, b_qkv2, w_out2, b_out2)


def reference(x, w_qkv_t, b_qkv, w_out_t, b_out, heads):
    """Pure-JAX f32 reference mirroring the PyTorch forward."""
    B, T, K = x.shape
    s = K // heads
    kqv = x @ w_qkv_t + b_qkv.reshape(1, 1, -1)                       # (B, T, 3K)
    kqv = kqv.reshape(B, T, heads, 3 * s).transpose(0, 2, 1, 3)       # (B, H, T, 3s)
    q, k_, v = kqv[..., :s], kqv[..., s:2 * s], kqv[..., 2 * s:]
    raw = jnp.einsum("bhtd,bhsd->bhts", q, k_) / math.sqrt(s)
    w = jax.nn.softmax(raw, axis=-1)
    res = jnp.einsum("bhts,bhsd->bhtd", w, v)                         # (B, H, T, s)
    res = res.transpose(0, 2, 1, 3).reshape(B, T, K)
    return res @ w_out_t + b_out.reshape(1, 1, -1)


if __name__ == "__main__":
    B, T, K, HEADS = 2, 8, 32, 4
    key = jax.random.PRNGKey(0)
    kx, k1, k2, k3, k4 = jax.random.split(key, 5)

    x = jax.random.normal(kx, (B, T, K), dtype=jnp.float32)

    # Deterministic nn.Linear-style init: uniform(-1/sqrt(fan_in), 1/sqrt(fan_in)).
    bound = 1.0 / math.sqrt(K)
    w_qkv_t = jax.random.uniform(k1, (K, 3 * K), jnp.float32, -bound, bound)  # pre-transposed
    b_qkv = jax.random.uniform(k2, (3 * K,), jnp.float32, -bound, bound)
    w_out_t = jax.random.uniform(k3, (K, K), jnp.float32, -bound, bound)      # pre-transposed
    b_out = jax.random.uniform(k4, (K,), jnp.float32, -bound, bound)

    # bf16 activations at the pallas_call boundary halve the x DMA; mathematically
    # identical to the in-kernel cast that would happen for f32 inputs.
    out = mh_self_attention(x.astype(jnp.bfloat16), w_qkv_t, b_qkv, w_out_t, b_out, HEADS)
    out = jax.block_until_ready(out)

    ref = reference(x, w_qkv_t, b_qkv, w_out_t, b_out, HEADS)
    assert out.shape == (B, T, K)
    max_err = float(jnp.max(jnp.abs(out - ref)))
    # bf16 MXU operands/activations + approximate reciprocal in the softmax => relaxed tolerance.
    assert jnp.allclose(out, ref, atol=3e-2, rtol=3e-2), f"mismatch vs reference (max abs err {max_err})"

    print("KERNEL_OK")
</pallas_src>

<mosaic_0001>
module attributes {stable_mosaic.version = 11 : i64} {
  func.func @mhsa_kernel(%arg0: i32, %arg1: memref<2x8x32xbf16, #tpu.memory_space<vmem>>, %arg2: memref<32x96xbf16, #tpu.memory_space<vmem>>, %arg3: memref<1x96xf32, #tpu.memory_space<vmem>>, %arg4: memref<32x32xbf16, #tpu.memory_space<vmem>>, %arg5: memref<1x32xf32, #tpu.memory_space<vmem>>, %arg6: memref<2x8x32xf32, #tpu.memory_space<vmem>>, %arg7: memref<2x8x32xbf16, #tpu.memory_space<vmem>>) attributes {dimension_semantics = [#tpu.dimension_semantics<parallel>], iteration_bounds = array<i64: 1>, scalar_prefetch = 0 : i64, scratch_operands = 1 : i64, tpu.core_type = #tpu.core_type<tc>, window_params = [{transform_indices = @transform_0, window_bounds = array<i64: 2, 8, 32>}, {pipeline_mode = #tpu.pipeline_mode<synchronous>, transform_indices = @transform_1, window_bounds = array<i64: 32, 96>}, {pipeline_mode = #tpu.pipeline_mode<synchronous>, transform_indices = @transform_2, window_bounds = array<i64: 1, 96>}, {pipeline_mode = #tpu.pipeline_mode<synchronous>, transform_indices = @transform_3, window_bounds = array<i64: 32, 32>}, {pipeline_mode = #tpu.pipeline_mode<synchronous>, transform_indices = @transform_4, window_bounds = array<i64: 1, 32>}, {transform_indices = @transform_5, window_bounds = array<i64: 2, 8, 32>}]} {
    %c0 = arith.constant 0 : index
    %c0_0 = arith.constant 0 : index
    %c0_1 = arith.constant 0 : index
    %0 = vector.load %arg1[%c0, %c0_0, %c0_1] : memref<2x8x32xbf16, #tpu.memory_space<vmem>>, vector<2x8x32xbf16>
    %1 = vector.shape_cast %0 : vector<2x8x32xbf16> to vector<16x32xbf16>
    %c0_2 = arith.constant 0 : index
    %c0_3 = arith.constant 0 : index
    %2 = vector.load %arg2[%c0_2, %c0_3] : memref<32x96xbf16, #tpu.memory_space<vmem>>, vector<32x96xbf16>
    %cst = arith.constant dense<0.000000e+00> : vector<16x96xf32>
    %3 = tpu.matmul %1, %2, %cst {dimension_numbers = #tpu.dot_dimension_numbers<[1], [0], [0], [1], [0, 0, 1, 1], [], []>} : vector<16x32xbf16>, vector<32x96xbf16>, vector<16x96xf32> -> vector<16x96xf32>
    %c0_4 = arith.constant 0 : index
    %c0_5 = arith.constant 0 : index
    %4 = vector.load %arg3[%c0_4, %c0_5] : memref<1x96xf32, #tpu.memory_space<vmem>>, vector<1x96xf32>
    %5 = vector.broadcast %4 : vector<1x96xf32> to vector<16x96xf32>
    %6 = arith.addf %3, %5 : vector<16x96xf32>
    %7 = arith.truncf %6 : vector<16x96xf32> to vector<16x96xbf16>
    %8 = vector.shape_cast %7 : vector<16x96xbf16> to vector<2x8x96xbf16>
    %9 = vector.extract_strided_slice %8 {offsets = [0, 0, 0], sizes = [2, 8, 8], strides = [1, 1, 1]} : vector<2x8x96xbf16> to vector<2x8x8xbf16>
    %10 = vector.extract_strided_slice %8 {offsets = [0, 0, 8], sizes = [2, 8, 8], strides = [1, 1, 1]} : vector<2x8x96xbf16> to vector<2x8x8xbf16>
    %11 = vector.extract_strided_slice %8 {offsets = [0, 0, 16], sizes = [2, 8, 8], strides = [1, 1, 1]} : vector<2x8x96xbf16> to vector<2x8x8xbf16>
    "tpu.trace_start"() <{level = 10 : i32, message = "btd,bud->btu"}> : () -> ()
    %cst_6 = arith.constant dense<0.000000e+00> : vector<2x8x8xf32>
    %12 = tpu.matmul %9, %10, %cst_6 {dimension_numbers = #tpu.dot_dimension_numbers<[2], [2], [1], [1], [0, 0, 0, 1, 1, 1], [0], [0]>} : vector<2x8x8xbf16>, vector<2x8x8xbf16>, vector<2x8x8xf32> -> vector<2x8x8xf32>
    "tpu.trace_stop"() : () -> ()
    %cst_7 = arith.constant dense<0xFF800000> : vector<2x8xf32>
    %13 = vector.multi_reduction <maximumf>, %12, %cst_7 [2] : vector<2x8x8xf32> to vector<2x8xf32>
    %14 = vector.shape_cast %13 : vector<2x8xf32> to vector<2x8x1xf32>
    %15 = vector.broadcast %14 : vector<2x8x1xf32> to vector<2x8x8xf32>
    %16 = arith.subf %12, %15 : vector<2x8x8xf32>
    %17 = math.exp %16 : vector<2x8x8xf32>
    %cst_8 = arith.constant dense<0.000000e+00> : vector<2x8xf32>
    %18 = vector.multi_reduction <add>, %17, %cst_8 [2] : vector<2x8x8xf32> to vector<2x8xf32>
    %19 = vector.shape_cast %18 : vector<2x8xf32> to vector<2x8x1xf32>
    %20 = tpu.reciprocal %19 {approx = true} : vector<2x8x1xf32> -> vector<2x8x1xf32>
    %21 = vector.broadcast %20 : vector<2x8x1xf32> to vector<2x8x8xf32>
    %22 = arith.mulf %17, %21 : vector<2x8x8xf32>
    %23 = arith.truncf %22 : vector<2x8x8xf32> to vector<2x8x8xbf16>
    "tpu.trace_start"() <{level = 10 : i32, message = "btu,bud->btd"}> : () -> ()
    %cst_9 = arith.constant dense<0.000000e+00> : vector<2x8x8xf32>
    %24 = tpu.matmul %23, %11, %cst_9 {dimension_numbers = #tpu.dot_dimension_numbers<[2], [1], [1], [2], [0, 0, 0, 1, 1, 2], [0], [0]>} : vector<2x8x8xbf16>, vector<2x8x8xbf16>, vector<2x8x8xf32> -> vector<2x8x8xf32>
    "tpu.trace_stop"() : () -> ()
    %25 = arith.truncf %24 : vector<2x8x8xf32> to vector<2x8x8xbf16>
    %c0_10 = arith.constant 0 : index
    %c0_11 = arith.constant 0 : index
    %c0_12 = arith.constant 0 : index
    %26 = vector.load %arg7[%c0_10, %c0_11, %c0_12] : memref<2x8x32xbf16, #tpu.memory_space<vmem>>, vector<2x8x8xbf16>
    tpu.vector_store %arg7[%c0_10, %c0_11, %c0_12], %25 {strides = array<i32>} : memref<2x8x32xbf16, #tpu.memory_space<vmem>>, vector<2x8x8xbf16>,
    %27 = vector.extract_strided_slice %8 {offsets = [0, 0, 24], sizes = [2, 8, 8], strides = [1, 1, 1]} : vector<2x8x96xbf16> to vector<2x8x8xbf16>
    %28 = vector.extract_strided_slice %8 {offsets = [0, 0, 32], sizes = [2, 8, 8], strides = [1, 1, 1]} : vector<2x8x96xbf16> to vector<2x8x8xbf16>
    %29 = vector.extract_strided_slice %8 {offsets = [0, 0, 40], sizes = [2, 8, 8], strides = [1, 1, 1]} : vector<2x8x96xbf16> to vector<2x8x8xbf16>
    "tpu.trace_start"() <{level = 10 : i32, message = "btd,bud->btu"}> : () -> ()
    %cst_13 = arith.constant dense<0.000000e+00> : vector<2x8x8xf32>
    %30 = tpu.matmul %27, %28, %cst_13 {dimension_numbers = #tpu.dot_dimension_numbers<[2], [2], [1], [1], [0, 0, 0, 1, 1, 1], [0], [0]>} : vector<2x8x8xbf16>, vector<2x8x8xbf16>, vector<2x8x8xf32> -> vector<2x8x8xf32>
    "tpu.trace_stop"() : () -> ()
    %cst_14 = arith.constant dense<0xFF800000> : vector<2x8xf32>
    %31 = vector.multi_reduction <maximumf>, %30, %cst_14 [2] : vector<2x8x8xf32> to vector<2x8xf32>
    %32 = vector.shape_cast %31 : vector<2x8xf32> to vector<2x8x1xf32>
    %33 = vector.broadcast %32 : vector<2x8x1xf32> to vector<2x8x8xf32>
    %34 = arith.subf %30, %33 : vector<2x8x8xf32>
    %35 = math.exp %34 : vector<2x8x8xf32>
    %cst_15 = arith.constant dense<0.000000e+00> : vector<2x8xf32>
    %36 = vector.multi_reduction <add>, %35, %cst_15 [2] : vector<2x8x8xf32> to vector<2x8xf32>
    %37 = vector.shape_cast %36 : vector<2x8xf32> to vector<2x8x1xf32>
    %38 = tpu.reciprocal %37 {approx = true} : vector<2x8x1xf32> -> vector<2x8x1xf32>
    %39 = vector.broadcast %38 : vector<2x8x1xf32> to vector<2x8x8xf32>
    %40 = arith.mulf %35, %39 : vector<2x8x8xf32>
    %41 = arith.truncf %40 : vector<2x8x8xf32> to vector<2x8x8xbf16>
    "tpu.trace_start"() <{level = 10 : i32, message = "btu,bud->btd"}> : () -> ()
    %cst_16 = arith.constant dense<0.000000e+00> : vector<2x8x8xf32>
    %42 = tpu.matmul %41, %29, %cst_16 {dimension_numbers = #tpu.dot_dimension_numbers<[2], [1], [1], [2], [0, 0, 0, 1, 1, 2], [0], [0]>} : vector<2x8x8xbf16>, vector<2x8x8xbf16>, vector<2x8x8xf32> -> vector<2x8x8xf32>
    "tpu.trace_stop"() : () -> ()
    %43 = arith.truncf %42 : vector<2x8x8xf32> to vector<2x8x8xbf16>
    %c0_17 = arith.constant 0 : index
    %c0_18 = arith.constant 0 : index
    %c8 = arith.constant 8 : index
    %44 = vector.load %arg7[%c0_17, %c0_18, %c8] : memref<2x8x32xbf16, #tpu.memory_space<vmem>>, vector<2x8x8xbf16>
    tpu.vector_store %arg7[%c0_17, %c0_18, %c8], %43 {strides = array<i32>} : memref<2x8x32xbf16, #tpu.memory_space<vmem>>, vector<2x8x8xbf16>,
    %45 = vector.extract_strided_slice %8 {offsets = [0, 0, 48], sizes = [2, 8, 8], strides = [1, 1, 1]} : vector<2x8x96xbf16> to vector<2x8x8xbf16>
    %46 = vector.extract_strided_slice %8 {offsets = [0, 0, 56], sizes = [2, 8, 8], strides = [1, 1, 1]} : vector<2x8x96xbf16> to vector<2x8x8xbf16>
    %47 = vector.extract_strided_slice %8 {offsets = [0, 0, 64], sizes = [2, 8, 8], strides = [1, 1, 1]} : vector<2x8x96xbf16> to vector<2x8x8xbf16>
    "tpu.trace_start"() <{level = 10 : i32, message = "btd,bud->btu"}> : () -> ()
    %cst_19 = arith.constant dense<0.000000e+00> : vector<2x8x8xf32>
    %48 = tpu.matmul %45, %46, %cst_19 {dimension_numbers = #tpu.dot_dimension_numbers<[2], [2], [1], [1], [0, 0, 0, 1, 1, 1], [0], [0]>} : vector<2x8x8xbf16>, vector<2x8x8xbf16>, vector<2x8x8xf32> -> vector<2x8x8xf32>
    "tpu.trace_stop"() : () -> ()
    %cst_20 = arith.constant dense<0xFF800000> : vector<2x8xf32>
    %49 = vector.multi_reduction <maximumf>, %48, %cst_20 [2] : vector<2x8x8xf32> to vector<2x8xf32>
    %50 = vector.shape_cast %49 : vector<2x8xf32> to vector<2x8x1xf32>
    %51 = vector.broadcast %50 : vector<2x8x1xf32> to vector<2x8x8xf32>
    %52 = arith.subf %48, %51 : vector<2x8x8xf32>
    %53 = math.exp %52 : vector<2x8x8xf32>
    %cst_21 = arith.constant dense<0.000000e+00> : vector<2x8xf32>
    %54 = vector.multi_reduction <add>, %53, %cst_21 [2] : vector<2x8x8xf32> to vector<2x8xf32>
    %55 = vector.shape_cast %54 : vector<2x8xf32> to vector<2x8x1xf32>
    %56 = tpu.reciprocal %55 {approx = true} : vector<2x8x1xf32> -> vector<2x8x1xf32>
    %57 = vector.broadcast %56 : vector<2x8x1xf32> to vector<2x8x8xf32>
    %58 = arith.mulf %53, %57 : vector<2x8x8xf32>
    %59 = arith.truncf %58 : vector<2x8x8xf32> to vector<2x8x8xbf16>
    "tpu.trace_start"() <{level = 10 : i32, message = "btu,bud->btd"}> : () -> ()
    %cst_22 = arith.constant dense<0.000000e+00> : vector<2x8x8xf32>
    %60 = tpu.matmul %59, %47, %cst_22 {dimension_numbers = #tpu.dot_dimension_numbers<[2], [1], [1], [2], [0, 0, 0, 1, 1, 2], [0], [0]>} : vector<2x8x8xbf16>, vector<2x8x8xbf16>, vector<2x8x8xf32> -> vector<2x8x8xf32>
    "tpu.trace_stop"() : () -> ()
    %61 = arith.truncf %60 : vector<2x8x8xf32> to vector<2x8x8xbf16>
    %c0_23 = arith.constant 0 : index
    %c0_24 = arith.constant 0 : index
    %c16 = arith.constant 16 : index
    %62 = vector.load %arg7[%c0_23, %c0_24, %c16] : memref<2x8x32xbf16, #tpu.memory_space<vmem>>, vector<2x8x8xbf16>
    tpu.vector_store %arg7[%c0_23, %c0_24, %c16], %61 {strides = array<i32>} : memref<2x8x32xbf16, #tpu.memory_space<vmem>>, vector<2x8x8xbf16>,
    %63 = vector.extract_strided_slice %8 {offsets = [0, 0, 72], sizes = [2, 8, 8], strides = [1, 1, 1]} : vector<2x8x96xbf16> to vector<2x8x8xbf16>
    %64 = vector.extract_strided_slice %8 {offsets = [0, 0, 80], sizes = [2, 8, 8], strides = [1, 1, 1]} : vector<2x8x96xbf16> to vector<2x8x8xbf16>
    %65 = vector.extract_strided_slice %8 {offsets = [0, 0, 88], sizes = [2, 8, 8], strides = [1, 1, 1]} : vector<2x8x96xbf16> to vector<2x8x8xbf16>
    "tpu.trace_start"() <{level = 10 : i32, message = "btd,bud->btu"}> : () -> ()
    %cst_25 = arith.constant dense<0.000000e+00> : vector<2x8x8xf32>
    %66 = tpu.matmul %63, %64, %cst_25 {dimension_numbers = #tpu.dot_dimension_numbers<[2], [2], [1], [1], [0, 0, 0, 1, 1, 1], [0], [0]>} : vector<2x8x8xbf16>, vector<2x8x8xbf16>, vector<2x8x8xf32> -> vector<2x8x8xf32>
    "tpu.trace_stop"() : () -> ()
    %cst_26 = arith.constant dense<0xFF800000> : vector<2x8xf32>
    %67 = vector.multi_reduction <maximumf>, %66, %cst_26 [2] : vector<2x8x8xf32> to vector<2x8xf32>
    %68 = vector.shape_cast %67 : vector<2x8xf32> to vector<2x8x1xf32>
    %69 = vector.broadcast %68 : vector<2x8x1xf32> to vector<2x8x8xf32>
    %70 = arith.subf %66, %69 : vector<2x8x8xf32>
    %71 = math.exp %70 : vector<2x8x8xf32>
    %cst_27 = arith.constant dense<0.000000e+00> : vector<2x8xf32>
    %72 = vector.multi_reduction <add>, %71, %cst_27 [2] : vector<2x8x8xf32> to vector<2x8xf32>
    %73 = vector.shape_cast %72 : vector<2x8xf32> to vector<2x8x1xf32>
    %74 = tpu.reciprocal %73 {approx = true} : vector<2x8x1xf32> -> vector<2x8x1xf32>
    %75 = vector.broadcast %74 : vector<2x8x1xf32> to vector<2x8x8xf32>
    %76 = arith.mulf %71, %75 : vector<2x8x8xf32>
    %77 = arith.truncf %76 : vector<2x8x8xf32> to vector<2x8x8xbf16>
    "tpu.trace_start"() <{level = 10 : i32, message = "btu,bud->btd"}> : () -> ()
    %cst_28 = arith.constant dense<0.000000e+00> : vector<2x8x8xf32>
    %78 = tpu.matmul %77, %65, %cst_28 {dimension_numbers = #tpu.dot_dimension_numbers<[2], [1], [1], [2], [0, 0, 0, 1, 1, 2], [0], [0]>} : vector<2x8x8xbf16>, vector<2x8x8xbf16>, vector<2x8x8xf32> -> vector<2x8x8xf32>
    "tpu.trace_stop"() : () -> ()
    %79 = arith.truncf %78 : vector<2x8x8xf32> to vector<2x8x8xbf16>
    %c0_29 = arith.constant 0 : index
    %c0_30 = arith.constant 0 : index
    %c24 = arith.constant 24 : index
    %80 = vector.load %arg7[%c0_29, %c0_30, %c24] : memref<2x8x32xbf16, #tpu.memory_space<vmem>>, vector<2x8x8xbf16>
    tpu.vector_store %arg7[%c0_29, %c0_30, %c24], %79 {strides = array<i32>} : memref<2x8x32xbf16, #tpu.memory_space<vmem>>, vector<2x8x8xbf16>,
    %c0_31 = arith.constant 0 : index
    %c0_32 = arith.constant 0 : index
    %c0_33 = arith.constant 0 : index
    %81 = vector.load %arg7[%c0_31, %c0_32, %c0_33] : memref<2x8x32xbf16, #tpu.memory_space<vmem>>, vector<2x8x32xbf16>
    %82 = vector.shape_cast %81 : vector<2x8x32xbf16> to vector<16x32xbf16>
    %c0_34 = arith.constant 0 : index
    %c0_35 = arith.constant 0 : index
    %83 = vector.load %arg4[%c0_34, %c0_35] : memref<32x32xbf16, #tpu.memory_space<vmem>>, vector<32x32xbf16>
    %cst_36 = arith.constant dense<0.000000e+00> : vector<16x32xf32>
    %84 = tpu.matmul %82, %83, %cst_36 {dimension_numbers = #tpu.dot_dimension_numbers<[1], [0], [0], [1], [0, 0, 1, 1], [], []>} : vector<16x32xbf16>, vector<32x32xbf16>, vector<16x32xf32> -> vector<16x32xf32>
    %c0_37 = arith.constant 0 : index
    %c0_38 = arith.constant 0 : index
    %85 = vector.load %arg5[%c0_37, %c0_38] : memref<1x32xf32, #tpu.memory_space<vmem>>, vector<1x32xf32>
    %86 = vector.broadcast %85 : vector<1x32xf32> to vector<16x32xf32>
    %87 = arith.addf %84, %86 : vector<16x32xf32>
    %88 = vector.shape_cast %87 : vector<16x32xf32> to vector<2x8x32xf32>
    %c0_39 = arith.constant 0 : index
    %c0_40 = arith.constant 0 : index
    %c0_41 = arith.constant 0 : index
    %89 = vector.load %arg6[%c0_39, %c0_40, %c0_41] : memref<2x8x32xf32, #tpu.memory_space<vmem>>, vector<2x8x32xf32>
    tpu.vector_store %arg6[%c0_39, %c0_40, %c0_41], %88 {strides = array<i32>} : memref<2x8x32xf32, #tpu.memory_space<vmem>>, vector<2x8x32xf32>,
    return
  }
  func.func @transform_0(%arg0: i32) -> (i32, i32, i32) {
    %c0_i32 = arith.constant 0 : i32
    %c0_i32_0 = arith.constant 0 : i32
    %c0_i32_1 = arith.constant 0 : i32
    return %arg0, %c0_i32, %c0_i32_0 : i32, i32, i32
  }
  func.func @transform_1(%arg0: i32) -> (i32, i32) {
    %c0_i32 = arith.constant 0 : i32
    %c0_i32_0 = arith.constant 0 : i32
    %c0_i32_1 = arith.constant 0 : i32
    return %c0_i32, %c0_i32_0 : i32, i32
  }
  func.func @transform_2(%arg0: i32) -> (i32, i32) {
    %c0_i32 = arith.constant 0 : i32
    %c0_i32_0 = arith.constant 0 : i32
    %c0_i32_1 = arith.constant 0 : i32
    return %c0_i32, %c0_i32_0 : i32, i32
  }
  func.func @transform_3(%arg0: i32) -> (i32, i32) {
    %c0_i32 = arith.constant 0 : i32
    %c0_i32_0 = arith.constant 0 : i32
    %c0_i32_1 = arith.constant 0 : i32
    return %c0_i32, %c0_i32_0 : i32, i32
  }
  func.func @transform_4(%arg0: i32) -> (i32, i32) {
    %c0_i32 = arith.constant 0 : i32
    %c0_i32_0 = arith.constant 0 : i32
    %c0_i32_1 = arith.constant 0 : i32
    return %c0_i32, %c0_i32_0 : i32, i32
  }
  func.func @transform_5(%arg0: i32) -> (i32, i32, i32) {
    %c0_i32 = arith.constant 0 : i32
    %c0_i32_0 = arith.constant 0 : i32
    %c0_i32_1 = arith.constant 0 : i32
    return %arg0, %c0_i32, %c0_i32_0 : i32, i32, i32
  }
}

</mosaic_0001>

<llo_original>
// kernel: tpu_custom_call.1
$region0: #{tpu_custom_call.1}
  #allocation0 [shape = 'u32[]', space=smem, size = 0x4, offset = 0x4, fixed_abs, tag = 'smem constant byte address 0x4 - core index']
  #allocation1 [shape = 'u32[72,128]{1,0:T(1,128)}', space=vmem, size = 0x9000, scoped, tag = 'internal scratch']
  #allocation2 [shape = 'bf16[2,8,32]{2,1,0:T(8,128)(2,1)}', space=vmem, size = 0x1000, scoped, tag = 'scratch operand']
  %s0 = inlined_call_operand.hbm [shape: bf16[2,8,32], index: 0, kind: input, shape index: {}]
  %s1 = inlined_call_operand.hbm [shape: bf16[32,96], index: 1, kind: input, shape index: {}]
  %s2 = inlined_call_operand.vmem [shape: f32[1,96], index: 2, kind: input, shape index: {}]
  %s3 = inlined_call_operand.hbm [shape: bf16[32,32], index: 3, kind: input, shape index: {}]
  %s4 = inlined_call_operand.vmem [shape: f32[1,32], index: 4, kind: input, shape index: {}]
  %s5 = inlined_call_operand.hbm [shape: f32[2,8,32], index: 5, kind: output, shape index: {}]
  %s6 = sld [smem:[#allocation0]]
  $region42: #{tpu_custom_call.1} parent=0
    _
  %s8 = ssub.s32 1, %s6
  %s9 = scalar_select 0, %s8, %s6
  $region1: #{tpu_custom_call.1} parent=0
    #allocation3 [shape = 'u8[4096]{0}', space=vmem, size = 0x1000, scoped, tag = 'input window, operand 0, single buffered']
    #allocation4 [shape = 's32[1]{0}', space=sflag, size = 0x4, scoped, tag = 'scoped memory for tpu_custom_call.1']
    #allocation5 [shape = 's32[1]{0}', space=sflag, size = 0x4, scoped, tag = 'scoped memory for tpu_custom_call.1']
    #allocation6 [shape = 'u8[8192]{0}', space=vmem, size = 0x2000, scoped, tag = 'input window, operand 1, single buffered']
    #allocation7 [shape = 's32[1]{0}', space=sflag, size = 0x4, scoped, tag = 'scoped memory for tpu_custom_call.1']
    #allocation8 [shape = 'u8[8192]{0}', space=vmem, size = 0x2000, scoped, tag = 'input window, operand 3, single buffered']
    #allocation9 [shape = 'u8[8192]{0}', space=vmem, size = 0x2000, scoped, tag = 'output window, operand 0, single buffered']
    %10 = vsyncpa [#allocation4], 0
    %11 = vsyncpa [#allocation7], 0
    %12 = vsyncpa [#allocation5], 0
    // Predicated region
    $region2: #{tpu_custom_call.1} parent=1 // pred_check
      _
    $region3: #{tpu_custom_call.1} parent=1 // pred_check_branch
      %14 = sbr.rel (0) target = $region5
    $region4: #{tpu_custom_call.1} parent=1 // pred_region
      %16 = vsyncadd [#allocation4], 0
      %s17 = sshll.u32 %s0, 4
      %s18 = int_to_ptr.hbm [resolvable:$true] %s17
      %s19 = sshll.u32 [#allocation3], 4
      %s20 = int_to_ptr.vmem [resolvable:$true] %s19
      %25 = dma.hbm_to_vmem [thread:$0]  %s18, 128, %s20, [#allocation4], 64, 64, 4
    $region5: #{tpu_custom_call.1} parent=1 // pred_fallthru
      _
    // Predicated region
    $region6: #{tpu_custom_call.1} parent=1 // pred_check
      _
    $region7: #{tpu_custom_call.1} parent=1 // pred_check_branch
      %27 = sbr.rel (0) target = $region9
    $region8: #{tpu_custom_call.1} parent=1 // pred_region
      %29 = vsyncadd [#allocation7], 0
      %s30 = sshll.u32 %s1, 4
      %s31 = int_to_ptr.hbm [resolvable:$true] %s30
      %s32 = sshll.u32 [#allocation6], 4
      %s33 = int_to_ptr.vmem [resolvable:$true] %s32
      %38 = dma.hbm_to_vmem [thread:$0]  %s31, 256, %s33, [#allocation7], 64, 64, 4
    $region9: #{tpu_custom_call.1} parent=1 // pred_fallthru
      _
    // Predicated region
    $region10: #{tpu_custom_call.1} parent=1 // pred_check
      _
    $region11: #{tpu_custom_call.1} parent=1 // pred_check_branch
      %40 = sbr.rel (0) target = $region13
    $region12: #{tpu_custom_call.1} parent=1 // pred_region
      _
    $region13: #{tpu_custom_call.1} parent=1 // pred_fallthru
      _
    // Predicated region
    $region14: #{tpu_custom_call.1} parent=1 // pred_check
      _
    $region15: #{tpu_custom_call.1} parent=1 // pred_check_branch
      %42 = sbr.rel (0) target = $region17
    $region16: #{tpu_custom_call.1} parent=1 // pred_region
      %44 = vsyncadd [#allocation7], 0
      %s45 = sshll.u32 %s3, 4
      %s46 = int_to_ptr.hbm [resolvable:$true] %s45
      %s47 = sshll.u32 [#allocation8], 4
      %s48 = int_to_ptr.vmem [resolvable:$true] %s47
      %53 = dma.hbm_to_vmem [thread:$0]  %s46, 256, %s48, [#allocation7], 64, 64, 4
    $region17: #{tpu_custom_call.1} parent=1 // pred_fallthru
      _
    // Predicated region
    $region18: #{tpu_custom_call.1} parent=1 // pred_check
      _
    $region19: #{tpu_custom_call.1} parent=1 // pred_check_branch
      %55 = sbr.rel (0) target = $region21
    $region20: #{tpu_custom_call.1} parent=1 // pred_region
      _
    $region21: #{tpu_custom_call.1} parent=1 // pred_fallthru
      _
    // Predicated region
    $region22: #{tpu_custom_call.1} parent=1 // pred_check
      _
    $region23: #{tpu_custom_call.1} parent=1 // pred_check_branch
      %57 = sbr.rel (0) target = $region25
    $region24: #{tpu_custom_call.1} parent=1 // pred_region
      %59 = dma.done [#allocation4], 128
    $region25: #{tpu_custom_call.1} parent=1 // pred_fallthru
      _
    // Predicated region
    $region26: #{tpu_custom_call.1} parent=1 // pred_check
      _
    $region27: #{tpu_custom_call.1} parent=1 // pred_check_branch
      %61 = sbr.rel (0) target = $region29
    $region28: #{tpu_custom_call.1} parent=1 // pred_region
      %63 = dma.done [#allocation7], 256
    $region29: #{tpu_custom_call.1} parent=1 // pred_fallthru
      _
    // Predicated region
    $region30: #{tpu_custom_call.1} parent=1 // pred_check
      _
    $region31: #{tpu_custom_call.1} parent=1 // pred_check_branch
      %65 = sbr.rel (0) target = $region33
    $region32: #{tpu_custom_call.1} parent=1 // pred_region
      %67 = dma.done [#allocation7], 256
    $region33: #{tpu_custom_call.1} parent=1 // pred_fallthru
      _
    %v69 = vld [vmem:[#allocation3] sm:$0xf]
    %v70 = vld [vmem:[#allocation3 + $0x4] sm:$0xf]
    %v71 = vld [vmem:[#allocation6] sm:$0xf]
    %v72 = vld [vmem:[#allocation6 + $0x4] sm:$0xf]
    %v73 = vld [vmem:[#allocation6 + $0x8] sm:$0xf]
    %v74 = vld [vmem:[#allocation6 + $0xc] sm:$0xf]
    %v75 = vld [vmem:[%s2] sm:$0x1]
    %v77 = vperm.slane %v75, 0
    %v81 = vunpack.c.l.b16 %v69
    %v82 = vunpack.c.l.b16 %v70
    %v83 = vpack.c.b16 %v82, %v81
    %v88 = vunpack.c.l.b16 %v71
    %v89 = vunpack.c.l.b16 %v72
    %v90 = vunpack.c.l.b16 %v73
    %v91 = vunpack.c.l.b16 %v74
    %v92 = vpack.c.b16 %v89, %v88
    %v93 = vpack.c.b16 %v91, %v90
    %vm96 = vcmask 261120
    %v98 = vsel %vm96, %v83, 0
    %100 = vmatpush.bf16.msra.mxu0 0
    %101 = vmatpush.bf16.msra.mxu0 0
    %102 = vmatpush.bf16.msra.mxu0 0
    %103 = vmatpush.bf16.msra.mxu0 0
    %104 = vmatpush.bf16.msra.mxu0 0
    %105 = vmatpush.bf16.msra.mxu0 0
    %106 = vmatpush.bf16.msra.mxu0 %v93
    %107 = vmatpush.bf16.msra.mxu0 %v92
    %108 = vmatmul.bf16.gmra.mxu0 %v98
    %v109 = vpop.f32.mrf.mxu0
    %v110 = vadd.f32 %v77, %v109
    %v111 = vpop.f32.mrf.mxu0
    %v112 = vadd.f32 %v77, %v111
    %113 = vdwg.mxu0
    %v114 = vpack.c.bf16 %v110, %v110
    %v115 = vpack.c.bf16 %v112, %v112
    %v117 = vunpack.c.l.b16 %v114
    %v118 = vpack.c.b16 %v117, %v117
    %119 = vrot.lane.b32.xlu0 %v118, 120
    %v120 = vpop.permute.xlu0 %119
    %vm121 = vcmask 64512
    %v123 = vsel %vm121, %v114, 0
    %v126 = vsel %vm121, %v120, 0
    %128 = vmatpush.bf16.xpose.msra.mxu0 0
    %129 = vmatpush.bf16.xpose.msra.mxu0 0
    %130 = vmatpush.bf16.xpose.msra.mxu0 0
    %131 = vmatpush.bf16.xpose.msra.mxu0 0
    %132 = vmatpush.bf16.xpose.msra.mxu0 0
    %133 = vmatpush.bf16.xpose.msra.mxu0 0
    %134 = vmatpush.bf16.xpose.msra.mxu0 0
    %135 = vmatpush.bf16.xpose.msra.mxu0 %v126
    %136 = vmatmul.bf16.gmra.mxu0 %v123
    %v137 = vpop.f32.mrf.mxu0
    %v138 = vadd.f32 0.0, %v137
    %v139 = vpop.f32.mrf.mxu0
    %140 = vdwg.mxu0
    %v142 = vunpack.c.l.b16 %v115
    %v143 = vpack.c.b16 %v142, %v142
    %144 = vrot.lane.b32.xlu0 %v143, 120
    %v145 = vpop.permute.xlu0 %144
    %v147 = vsel %vm121, %v115, 0
    %v150 = vsel %vm121, %v145, 0
    %152 = vmatpush.bf16.xpose.msra.mxu0 0
    %153 = vmatpush.bf16.xpose.msra.mxu0 0
    %154 = vmatpush.bf16.xpose.msra.mxu0 0
    %155 = vmatpush.bf16.xpose.msra.mxu0 0
    %156 = vmatpush.bf16.xpose.msra.mxu0 0
    %157 = vmatpush.bf16.xpose.msra.mxu0 0
    %158 = vmatpush.bf16.xpose.msra.mxu0 0
    %159 = vmatpush.bf16.xpose.msra.mxu0 %v150
    %160 = vmatmul.bf16.gmra.mxu0 %v147
    %v161 = vpop.f32.mrf.mxu0
    %v162 = vadd.f32 0.0, %v161
    %v163 = vpop.f32.mrf.mxu0
    %164 = vdwg.mxu0
    %v165 = vsel %vm121, %v138, -inf
    %166 = vmax.xlane.f32.xlu0 %v165
    %v167 = vpop.xlane.xlu0 %166
    %v168 = vsel %vm121, %v162, -inf
    %169 = vmax.xlane.f32.xlu0 %v168
    %v170 = vpop.xlane.xlu0 %169
    %v171 = vsub.f32 %v138, %v167
    %v172 = vsub.f32 %v162, %v170
    %v173 = vmul.f32 %v171, 1.442695
    %v174 = vpow.pop %v173
    %v175 = vmul.f32 %v172, 1.442695
    %v176 = vpow.pop %v175
    %v177 = vsel %vm121, %v174, 0.0
    %178 = vadd.xlane.f32.xlu0 %v177
    %v179 = vpop.xlane.xlu0 %178
    %v180 = vsel %vm121, %v176, 0.0
    %181 = vadd.xlane.f32.xlu0 %v180
    %v182 = vpop.xlane.xlu0 %181
    %v183 = vrcp.pop %v179
    %v184 = vrcp.pop %v182
    %v185 = vmul.f32 %v174, %v183
    %v186 = vmul.f32 %v176, %v184
    %v187 = vpack.c.bf16 %v185, %v185
    %v188 = vpack.c.bf16 %v186, %v186
    %189 = vrot.lane.b32.xlu0 %v118, 112
    %v190 = vpop.permute.xlu0 %189
    %v192 = vsel %vm121, %v187, 0
    %vm194 = vcmask 1043456
    %v196 = vsel %vm194, %v190, 0
    %198 = vmatpush.bf16.msra.mxu0 0
    %199 = vmatpush.bf16.msra.mxu0 0
    %200 = vmatpush.bf16.msra.mxu0 0
    %201 = vmatpush.bf16.msra.mxu0 0
    %202 = vmatpush.bf16.msra.mxu0 0
    %203 = vmatpush.bf16.msra.mxu0 0
    %204 = vmatpush.bf16.msra.mxu0 0
    %205 = vmatpush.bf16.msra.mxu0 %v196
    %206 = vmatmul.bf16.gmra.mxu0 %v192
    %v207 = vpop.f32.mrf.mxu0
    %v208 = vadd.f32 0.0, %v207
    %v209 = vpop.f32.mrf.mxu0
    %210 = vdwg.mxu0
    %211 = vrot.lane.b32.xlu0 %v143, 112
    %v212 = vpop.permute.xlu0 %211
    %v214 = vsel %vm121, %v188, 0
    %v217 = vsel %vm194, %v212, 0
    %219 = vmatpush.bf16.msra.mxu0 0
    %220 = vmatpush.bf16.msra.mxu0 0
    %221 = vmatpush.bf16.msra.mxu0 0
    %222 = vmatpush.bf16.msra.mxu0 0
    %223 = vmatpush.bf16.msra.mxu0 0
    %224 = vmatpush.bf16.msra.mxu0 0
    %225 = vmatpush.bf16.msra.mxu0 0
    %226 = vmatpush.bf16.msra.mxu0 %v217
    %227 = vmatmul.bf16.gmra.mxu0 %v214
    %v228 = vpop.f32.mrf.mxu0
    %v229 = vadd.f32 0.0, %v228
    %v230 = vpop.f32.mrf.mxu0
    %231 = vdwg.mxu0
    %v232 = vpack.c.bf16 %v208, %v208
    %v233 = vpack.c.bf16 %v229, %v229
    %vm234 = vcmask 60416
    %235 = vst.msk [vmem:[#allocation2] sm:$0xf] %vm234, %v232
    %236 = vst.msk [vmem:[#allocation2 + $0x4] sm:$0xf] %vm234, %v233
    %237 = vrot.lane.b32.xlu0 %v118, 104
    %v238 = vpop.permute.xlu0 %237
    %239 = vrot.lane.b32.xlu0 %v118, 96
    %v240 = vpop.permute.xlu0 %239
    %v242 = vsel %vm121, %v238, 0
    %v245 = vsel %vm121, %v240, 0
    %247 = vmatpush.bf16.xpose.msra.mxu0 0
    %248 = vmatpush.bf16.xpose.msra.mxu0 0
    %249 = vmatpush.bf16.xpose.msra.mxu0 0
    %250 = vmatpush.bf16.xpose.msra.mxu0 0
    %251 = vmatpush.bf16.xpose.msra.mxu0 0
    %252 = vmatpush.bf16.xpose.msra.mxu0 0
    %253 = vmatpush.bf16.xpose.msra.mxu0 0
    %254 = vmatpush.bf16.xpose.msra.mxu0 %v245
    %255 = vmatmul.bf16.gmra.mxu0 %v242
    %v256 = vpop.f32.mrf.mxu0
    %v257 = vadd.f32 0.0, %v256
    %v258 = vpop.f32.mrf.mxu0
    %259 = vdwg.mxu0
    %260 = vrot.lane.b32.xlu0 %v143, 104
    %v261 = vpop.permute.xlu0 %260
    %262 = vrot.lane.b32.xlu0 %v143, 96
    %v263 = vpop.permute.xlu0 %262
    %v265 = vsel %vm121, %v261, 0
    %v268 = vsel %vm121, %v263, 0
    %270 = vmatpush.bf16.xpose.msra.mxu0 0
    %271 = vmatpush.bf16.xpose.msra.mxu0 0
    %272 = vmatpush.bf16.xpose.msra.mxu0 0
    %273 = vmatpush.bf16.xpose.msra.mxu0 0
    %274 = vmatpush.bf16.xpose.msra.mxu0 0
    %275 = vmatpush.bf16.xpose.msra.mxu0 0
    %276 = vmatpush.bf16.xpose.msra.mxu0 0
    %277 = vmatpush.bf16.xpose.msra.mxu0 %v268
    %278 = vmatmul.bf16.gmra.mxu0 %v265
    %v279 = vpop.f32.mrf.mxu0
    %v280 = vadd.f32 0.0, %v279
    %v281 = vpop.f32.mrf.mxu0
    %282 = vdwg.mxu0
    %v283 = vsel %vm121, %v257, -inf
    %284 = vmax.xlane.f32.xlu0 %v283
    %v285 = vpop.xlane.xlu0 %284
    %v286 = vsel %vm121, %v280, -inf
    %287 = vmax.xlane.f32.xlu0 %v286
    %v288 = vpop.xlane.xlu0 %287
    %v289 = vsub.f32 %v257, %v285
    %v290 = vsub.f32 %v280, %v288
    %v291 = vmul.f32 %v289, 1.442695
    %v292 = vpow.pop %v291
    %v293 = vmul.f32 %v290, 1.442695
    %v294 = vpow.pop %v293
    %v295 = vsel %vm121, %v292, 0.0
    %296 = vadd.xlane.f32.xlu0 %v295
    %v297 = vpop.xlane.xlu0 %296
    %v298 = vsel %vm121, %v294, 0.0
    %299 = vadd.xlane.f32.xlu0 %v298
    %v300 = vpop.xlane.xlu0 %299
    %v301 = vrcp.pop %v297
    %v302 = vrcp.pop %v300
    %v303 = vmul.f32 %v292, %v301
    %v304 = vmul.f32 %v294, %v302
    %v305 = vpack.c.bf16 %v303, %v303
    %v306 = vpack.c.bf16 %v304, %v304
    %307 = vrot.lane.b32.xlu0 %v118, 88
    %v308 = vpop.permute.xlu0 %307
    %v310 = vsel %vm121, %v305, 0
    %v313 = vsel %vm194, %v308, 0
    %315 = vmatpush.bf16.msra.mxu0 0
    %316 = vmatpush.bf16.msra.mxu0 0
    %317 = vmatpush.bf16.msra.mxu0 0
    %318 = vmatpush.bf16.msra.mxu0 0
    %319 = vmatpush.bf16.msra.mxu0 0
    %320 = vmatpush.bf16.msra.mxu0 0
    %321 = vmatpush.bf16.msra.mxu0 0
    %322 = vmatpush.bf16.msra.mxu0 %v313
    %323 = vmatmul.bf16.gmra.mxu0 %v310
    %v324 = vpop.f32.mrf.mxu0
    %v325 = vadd.f32 0.0, %v324
    %v326 = vpop.f32.mrf.mxu0
    %327 = vdwg.mxu0
    %328 = vrot.lane.b32.xlu0 %v143, 88
    %v329 = vpop.permute.xlu0 %328
    %v331 = vsel %vm121, %v306, 0
    %v334 = vsel %vm194, %v329, 0
    %336 = vmatpush.bf16.msra.mxu0 0
    %337 = vmatpush.bf16.msra.mxu0 0
    %338 = vmatpush.bf16.msra.mxu0 0
    %339 = vmatpush.bf16.msra.mxu0 0
    %340 = vmatpush.bf16.msra.mxu0 0
    %341 = vmatpush.bf16.msra.mxu0 0
    %342 = vmatpush.bf16.msra.mxu0 0
    %343 = vmatpush.bf16.msra.mxu0 %v334
    %344 = vmatmul.bf16.gmra.mxu0 %v331
    %v345 = vpop.f32.mrf.mxu0
    %v346 = vadd.f32 0.0, %v345
    %v347 = vpop.f32.mrf.mxu0
    %348 = vdwg.mxu0
    %v349 = vpack.c.bf16 %v325, %v325
    %v350 = vpack.c.bf16 %v346, %v346
    %353 = vrot.lane.b32.xlu0 %v349, 8
    %v354 = vpop.permute.xlu0 %353
    %355 = vrot.lane.b32.xlu0 %v350, 8
    %v356 = vpop.permute.xlu0 %355
    %vm359 = vcmask 126016
    %360 = vst.msk [vmem:[#allocation2] sm:$0xf] %vm359, %v354
    %361 = vst.msk [vmem:[#allocation2 + $0x4] sm:$0xf] %vm359, %v356
    %362 = vrot.lane.b32.xlu0 %v118, 80
    %v363 = vpop.permute.xlu0 %362
    %364 = vrot.lane.b32.xlu0 %v118, 72
    %v365 = vpop.permute.xlu0 %364
    %v367 = vsel %vm121, %v363, 0
    %v370 = vsel %vm121, %v365, 0
    %372 = vmatpush.bf16.xpose.msra.mxu0 0
    %373 = vmatpush.bf16.xpose.msra.mxu0 0
    %374 = vmatpush.bf16.xpose.msra.mxu0 0
    %375 = vmatpush.bf16.xpose.msra.mxu0 0
    %376 = vmatpush.bf16.xpose.msra.mxu0 0
    %377 = vmatpush.bf16.xpose.msra.mxu0 0
    %378 = vmatpush.bf16.xpose.msra.mxu0 0
    %379 = vmatpush.bf16.xpose.msra.mxu0 %v370
    %380 = vmatmul.bf16.gmra.mxu0 %v367
    %v381 = vpop.f32.mrf.mxu0
    %v382 = vadd.f32 0.0, %v381
    %v383 = vpop.f32.mrf.mxu0
    %384 = vdwg.mxu0
    %385 = vrot.lane.b32.xlu0 %v143, 80
    %v386 = vpop.permute.xlu0 %385
    %387 = vrot.lane.b32.xlu0 %v143, 72
    %v388 = vpop.permute.xlu0 %387
    %v390 = vsel %vm121, %v386, 0
    %v393 = vsel %vm121, %v388, 0
    %395 = vmatpush.bf16.xpose.msra.mxu0 0
    %396 = vmatpush.bf16.xpose.msra.mxu0 0
    %397 = vmatpush.bf16.xpose.msra.mxu0 0
    %398 = vmatpush.bf16.xpose.msra.mxu0 0
    %399 = vmatpush.bf16.xpose.msra.mxu0 0
    %400 = vmatpush.bf16.xpose.msra.mxu0 0
    %401 = vmatpush.bf16.xpose.msra.mxu0 0
    %402 = vmatpush.bf16.xpose.msra.mxu0 %v393
    %403 = vmatmul.bf16.gmra.mxu0 %v390
    %v404 = vpop.f32.mrf.mxu0
    %v405 = vadd.f32 0.0, %v404
    %v406 = vpop.f32.mrf.mxu0
    %407 = vdwg.mxu0
    %v408 = vsel %vm121, %v382, -inf
    %409 = vmax.xlane.f32.xlu0 %v408
    %v410 = vpop.xlane.xlu0 %409
    %v411 = vsel %vm121, %v405, -inf
    %412 = vmax.xlane.f32.xlu0 %v411
    %v413 = vpop.xlane.xlu0 %412
    %v414 = vsub.f32 %v382, %v410
    %v415 = vsub.f32 %v405, %v413
    %v416 = vmul.f32 %v414, 1.442695
    %v417 = vpow.pop %v416
    %v418 = vmul.f32 %v415, 1.442695
    %v419 = vpow.pop %v418
    %v420 = vsel %vm121, %v417, 0.0
    %421 = vadd.xlane.f32.xlu0 %v420
    %v422 = vpop.xlane.xlu0 %421
    %v423 = vsel %vm121, %v419, 0.0
    %424 = vadd.xlane.f32.xlu0 %v423
    %v425 = vpop.xlane.xlu0 %424
    %v426 = vrcp.pop %v422
    %v427 = vrcp.pop %v425
    %v428 = vmul.f32 %v417, %v426
    %v429 = vmul.f32 %v419, %v427
    %v430 = vpack.c.bf16 %v428, %v428
    %v431 = vpack.c.bf16 %v429, %v429
    %432 = vrot.lane.b32.xlu0 %v118, 64
    %v433 = vpop.permute.xlu0 %432
    %v435 = vsel %vm121, %v430, 0
    %v438 = vsel %vm194, %v433, 0
    %440 = vmatpush.bf16.msra.mxu0 0
    %441 = vmatpush.bf16.msra.mxu0 0
    %442 = vmatpush.bf16.msra.mxu0 0
    %443 = vmatpush.bf16.msra.mxu0 0
    %444 = vmatpush.bf16.msra.mxu0 0
    %445 = vmatpush.bf16.msra.mxu0 0
    %446 = vmatpush.bf16.msra.mxu0 0
    %447 = vmatpush.bf16.msra.mxu0 %v438
    %448 = vmatmul.bf16.gmra.mxu0 %v435
    %v449 = vpop.f32.mrf.mxu0
    %v450 = vadd.f32 0.0, %v449
    %v451 = vpop.f32.mrf.mxu0
    %452 = vdwg.mxu0
    %453 = vrot.lane.b32.xlu0 %v143, 64
    %v454 = vpop.permute.xlu0 %453
    %v456 = vsel %vm121, %v431, 0
    %v459 = vsel %vm194, %v454, 0
    %461 = vmatpush.bf16.msra.mxu0 0
    %462 = vmatpush.bf16.msra.mxu0 0
    %463 = vmatpush.bf16.msra.mxu0 0
    %464 = vmatpush.bf16.msra.mxu0 0
    %465 = vmatpush.bf16.msra.mxu0 0
    %466 = vmatpush.bf16.msra.mxu0 0
    %467 = vmatpush.bf16.msra.mxu0 0
    %468 = vmatpush.bf16.msra.mxu0 %v459
    %469 = vmatmul.bf16.gmra.mxu0 %v456
    %v470 = vpop.f32.mrf.mxu0
    %v471 = vadd.f32 0.0, %v470
    %v472 = vpop.f32.mrf.mxu0
    %473 = vdwg.mxu0
    %v474 = vpack.c.bf16 %v450, %v450
    %v475 = vpack.c.bf16 %v471, %v471
    %478 = vrot.lane.b32.xlu0 %v474, 16
    %v479 = vpop.permute.xlu0 %478
    %480 = vrot.lane.b32.xlu0 %v475, 16
    %v481 = vpop.permute.xlu0 %480
    %vm484 = vcmask 191616
    %485 = vst.msk [vmem:[#allocation2] sm:$0xf] %vm484, %v479
    %486 = vst.msk [vmem:[#allocation2 + $0x4] sm:$0xf] %vm484, %v481
    %487 = vrot.lane.b32.xlu0 %v118, 56
    %v488 = vpop.permute.xlu0 %487
    %489 = vrot.lane.b32.xlu0 %v118, 48
    %v490 = vpop.permute.xlu0 %489
    %v492 = vsel %vm121, %v488, 0
    %v495 = vsel %vm121, %v490, 0
    %497 = vmatpush.bf16.xpose.msra.mxu0 0
    %498 = vmatpush.bf16.xpose.msra.mxu0 0
    %499 = vmatpush.bf16.xpose.msra.mxu0 0
    %500 = vmatpush.bf16.xpose.msra.mxu0 0
    %501 = vmatpush.bf16.xpose.msra.mxu0 0
    %502 = vmatpush.bf16.xpose.msra.mxu0 0
    %503 = vmatpush.bf16.xpose.msra.mxu0 0
    %504 = vmatpush.bf16.xpose.msra.mxu0 %v495
    %505 = vmatmul.bf16.gmra.mxu0 %v492
    %v506 = vpop.f32.mrf.mxu0
    %v507 = vadd.f32 0.0, %v506
    %v508 = vpop.f32.mrf.mxu0
    %509 = vdwg.mxu0
    %510 = vrot.lane.b32.xlu0 %v143, 56
    %v511 = vpop.permute.xlu0 %510
    %512 = vrot.lane.b32.xlu0 %v143, 48
    %v513 = vpop.permute.xlu0 %512
    %v515 = vsel %vm121, %v511, 0
    %v518 = vsel %vm121, %v513, 0
    %520 = vmatpush.bf16.xpose.msra.mxu0 0
    %521 = vmatpush.bf16.xpose.msra.mxu0 0
    %522 = vmatpush.bf16.xpose.msra.mxu0 0
    %523 = vmatpush.bf16.xpose.msra.mxu0 0
    %524 = vmatpush.bf16.xpose.msra.mxu0 0
    %525 = vmatpush.bf16.xpose.msra.mxu0 0
    %526 = vmatpush.bf16.xpose.msra.mxu0 0
    %527 = vmatpush.bf16.xpose.msra.mxu0 %v518
    %528 = vmatmul.bf16.gmra.mxu0 %v515
    %v529 = vpop.f32.mrf.mxu0
    %v530 = vadd.f32 0.0, %v529
    %v531 = vpop.f32.mrf.mxu0
    %532 = vdwg.mxu0
    %v533 = vsel %vm121, %v507, -inf
    %534 = vmax.xlane.f32.xlu0 %v533
    %v535 = vpop.xlane.xlu0 %534
    %v536 = vsel %vm121, %v530, -inf
    %537 = vmax.xlane.f32.xlu0 %v536
    %v538 = vpop.xlane.xlu0 %537
    %v539 = vsub.f32 %v507, %v535
    %v540 = vsub.f32 %v530, %v538
    %v541 = vmul.f32 %v539, 1.442695
    %v542 = vpow.pop %v541
    %v543 = vmul.f32 %v540, 1.442695
    %v544 = vpow.pop %v543
    %v545 = vsel %vm121, %v542, 0.0
    %546 = vadd.xlane.f32.xlu0 %v545
    %v547 = vpop.xlane.xlu0 %546
    %v548 = vsel %vm121, %v544, 0.0
    %549 = vadd.xlane.f32.xlu0 %v548
    %v550 = vpop.xlane.xlu0 %549
    %v551 = vrcp.pop %v547
    %v552 = vrcp.pop %v550
    %v553 = vmul.f32 %v542, %v551
    %v554 = vmul.f32 %v544, %v552
    %v555 = vpack.c.bf16 %v553, %v553
    %v556 = vpack.c.bf16 %v554, %v554
    %557 = vrot.lane.b32.xlu0 %v118, 40
    %v558 = vpop.permute.xlu0 %557
    %v560 = vsel %vm121, %v555, 0
    %v563 = vsel %vm194, %v558, 0
    %565 = vmatpush.bf16.msra.mxu0 0
    %566 = vmatpush.bf16.msra.mxu0 0
    %567 = vmatpush.bf16.msra.mxu0 0
    %568 = vmatpush.bf16.msra.mxu0 0
    %569 = vmatpush.bf16.msra.mxu0 0
    %570 = vmatpush.bf16.msra.mxu0 0
    %571 = vmatpush.bf16.msra.mxu0 0
    %572 = vmatpush.bf16.msra.mxu0 %v563
    %573 = vmatmul.bf16.gmra.mxu0 %v560
    %v574 = vpop.f32.mrf.mxu0
    %v575 = vadd.f32 0.0, %v574
    %v576 = vpop.f32.mrf.mxu0
    %577 = vdwg.mxu0
    %578 = vrot.lane.b32.xlu0 %v143, 40
    %v579 = vpop.permute.xlu0 %578
    %v581 = vsel %vm121, %v556, 0
    %v584 = vsel %vm194, %v579, 0
    %586 = vmatpush.bf16.msra.mxu0 0
    %587 = vmatpush.bf16.msra.mxu0 0
    %588 = vmatpush.bf16.msra.mxu0 0
    %589 = vmatpush.bf16.msra.mxu0 0
    %590 = vmatpush.bf16.msra.mxu0 0
    %591 = vmatpush.bf16.msra.mxu0 0
    %592 = vmatpush.bf16.msra.mxu0 0
    %593 = vmatpush.bf16.msra.mxu0 %v584
    %594 = vmatmul.bf16.gmra.mxu0 %v581
    %v595 = vpop.f32.mrf.mxu0
    %v596 = vadd.f32 0.0, %v595
    %v597 = vpop.f32.mrf.mxu0
    %598 = vdwg.mxu0
    %v599 = vpack.c.bf16 %v575, %v575
    %v600 = vpack.c.bf16 %v596, %v596
    %603 = vrot.lane.b32.xlu0 %v599, 24
    %v604 = vpop.permute.xlu0 %603
    %605 = vrot.lane.b32.xlu0 %v600, 24
    %v606 = vpop.permute.xlu0 %605
    %vm609 = vcmask 257216
    %610 = vst.msk [vmem:[#allocation2] sm:$0xf] %vm609, %v604
    %611 = vst.msk [vmem:[#allocation2 + $0x4] sm:$0xf] %vm609, %v606
    %v612 = vld [vmem:[#allocation2] sm:$0xf]
    %v613 = vld [vmem:[#allocation2 + $0x4] sm:$0xf]
    %v614 = vld [vmem:[#allocation8] sm:$0xf]
    %v615 = vld [vmem:[#allocation8 + $0x4] sm:$0xf]
    %v616 = vld [vmem:[#allocation8 + $0x8] sm:$0xf]
    %v617 = vld [vmem:[#allocation8 + $0xc] sm:$0xf]
    %v618 = vld [vmem:[%s4] sm:$0x1]
    %v620 = vperm.slane %v618, 0
    %v624 = vunpack.c.l.b16 %v612
    %v625 = vunpack.c.l.b16 %v613
    %v626 = vpack.c.b16 %v625, %v624
    %v631 = vunpack.c.l.b16 %v614
    %v632 = vunpack.c.l.b16 %v615
    %v633 = vunpack.c.l.b16 %v616
    %v634 = vunpack.c.l.b16 %v617
    %v635 = vpack.c.b16 %v632, %v631
    %v636 = vpack.c.b16 %v634, %v633
    %v640 = vsel %vm96, %v626, 0
    %642 = vmatpush.bf16.msra.mxu0 0
    %643 = vmatpush.bf16.msra.mxu0 0
    %644 = vmatpush.bf16.msra.mxu0 0
    %645 = vmatpush.bf16.msra.mxu0 0
    %646 = vmatpush.bf16.msra.mxu0 0
    %647 = vmatpush.bf16.msra.mxu0 0
    %648 = vmatpush.bf16.msra.mxu0 %v636
    %649 = vmatpush.bf16.msra.mxu0 %v635
    %650 = vmatmul.bf16.gmra.mxu0 %v640
    %v651 = vpop.f32.mrf.mxu0
    %v652 = vadd.f32 %v620, %v651
    %v653 = vpop.f32.mrf.mxu0
    %v654 = vadd.f32 %v620, %v653
    %655 = vdwg.mxu0
    %656 = vst.msk [vmem:[#allocation9] sm:$0xff] %vm96, %v652
    %657 = vst.msk [vmem:[#allocation9 + $0x8] sm:$0xff] %vm96, %v654
    // Predicated region
    $region34: #{tpu_custom_call.1} parent=1 // pred_check
      _
    $region35: #{tpu_custom_call.1} parent=1 // pred_check_branch
      %659 = sbr.rel (0) target = $region37
    $region36: #{tpu_custom_call.1} parent=1 // pred_region
      %661 = vsyncadd [#allocation5], 0
      %s662 = sshll.u32 [#allocation9], 4
      %s663 = int_to_ptr.vmem [resolvable:$true] %s662
      %s664 = sshll.u32 %s5, 4
      %s665 = int_to_ptr.hbm [resolvable:$true] %s664
      %670 = dma.vmem_to_hbm [thread:$0]  %s663, 256, %s665, [#allocation5], 128, 128, 8
    $region37: #{tpu_custom_call.1} parent=1 // pred_fallthru
      _
    // Predicated region
    $region38: #{tpu_custom_call.1} parent=1 // pred_check
      _
    $region39: #{tpu_custom_call.1} parent=1 // pred_check_branch
      %672 = sbr.rel (0) target = $region41
    $region40: #{tpu_custom_call.1} parent=1 // pred_region
      %674 = dma.done [#allocation5], 256
    $region41: #{tpu_custom_call.1} parent=1 // pred_fallthru
      _
    %675 = vsyncpa [#allocation4], 1
    %676 = vsyncpa [#allocation7], 1
    %677 = vsyncpa [#allocation5], 1

</llo_original>
